<compile_context>
chip_gen: v5e
topology: v5e:2x2
jax: 0.10.0
libtpu: 0.0.40
codegen_flags: <defaults>
</compile_context>

<pallas_src>
import functools
import math

import jax
import jax.numpy as jnp
from jax.experimental import pallas as pl
from jax.experimental.pallas import tpu as pltpu

_SUB = 16          # batch-tile sublane alignment (keeps bf16 blocks tile-friendly)
_LANE = 128        # lane width / feature padding granularity
_NEG_SLOPE = 0.02  # LeakyReLU negative slope


def _round_up(x, m):
    return (x + m - 1) // m * m


def _vmem_cap_bytes():
    """Physical VMEM of the local chip (128 MiB v5e/v6e, 64 MiB v7x)."""
    try:
        info = pltpu.get_tpu_info()
        for name in ("vmem_capacity_bytes", "vmem_size_bytes", "vmem_bytes"):
            v = getattr(info, name, None)
            if v:
                return int(v)
    except Exception:
        pass
    return 64 << 20  # conservative: assume v7x


def _resident_spec(block_shape, index_map):
    """BlockSpec for an input that is identical at every grid step: fetch once,
    keep a single VMEM copy (no double buffering)."""
    try:
        return pl.BlockSpec(block_shape, index_map, pipeline_mode=pl.Buffered(1))
    except Exception:  # older jax without pipeline_mode / pl.Buffered
        return pl.BlockSpec(block_shape, index_map)


def _pick_tile(pdim, cap=512):
    """Largest tile <= cap that divides pdim (pdim is a multiple of 128)."""
    for t in (512, 384, 256, 128):
        if t <= cap and pdim % t == 0:
            return t
    return _LANE


# ---------------------------------------------------------------------------
# Kernels
# ---------------------------------------------------------------------------
def _fused_mlp_kernel(x_ref, *refs, n_layers):
    """Whole MLP on one VMEM-resident batch tile.

    refs = (w0, b0, ..., w_{L-1}, b_{L-1}, o_ref).  The running activation
    lives in vregs / compiler VMEM between layers; only the final lane-dense
    result is stored.  Matmuls run in bf16 on the MXU with f32 accumulation;
    the bias + LeakyReLU epilogue stays in f32.
    """
    o_ref = refs[-1]
    h = x_ref[...]                                       # bf16 [bm, F0_pad]
    for li in range(n_layers):
        w = refs[2 * li][...]                            # bf16 [Fi_pad, Fo_pad]
        b = refs[2 * li + 1][...].astype(jnp.float32)    # f32  [1, Fo_pad]
        y = jnp.dot(h, w, preferred_element_type=jnp.float32) + b
        if li != n_layers - 1:
            y = jnp.where(y >= 0.0, y, _NEG_SLOPE * y)   # LeakyReLU(0.02)
            h = y.astype(jnp.bfloat16)                   # next layer's MXU input
        else:
            h = y
    o_ref[...] = h.astype(o_ref.dtype)


def _linear_act_kernel(x_ref, w_ref, b_ref, o_ref, acc_ref, *, apply_act):
    """One Linear (+ optional LeakyReLU) tiled over (batch, N, K) with a VMEM
    f32 accumulator.  Fallback when the resident weight set does not fit."""
    @pl.when(pl.program_id(2) == 0)
    def _():
        acc_ref[...] = jnp.zeros_like(acc_ref)

    acc_ref[...] += jnp.dot(x_ref[...], w_ref[...],
                            preferred_element_type=jnp.float32)

    @pl.when(pl.program_id(2) == pl.num_programs(2) - 1)
    def _():
        y = acc_ref[...] + b_ref[...].astype(jnp.float32)
        if apply_act:
            y = jnp.where(y >= 0.0, y, _NEG_SLOPE * y)
        o_ref[...] = y.astype(o_ref.dtype)


# ---------------------------------------------------------------------------
# Wrapper
# ---------------------------------------------------------------------------
def make_mlp_forward(params, *, block_m=512, force_tiled=False):
    """Build a jitted forward pass for the MLP.

    params: list of (w [F_in, F_out], b [F_out]) — weights transposed vs.
    PyTorch.  Padding + bf16 casting of the weights happens HERE, once, so the
    per-call hot path never re-materializes them in HBM.
    """
    n_layers = len(params)
    dims = [params[0][0].shape[0]] + [w.shape[1] for (w, _) in params]
    f_in, f_out = dims[0], dims[-1]
    # Lane-dense padding; exact under zero padding (padded input columns hit
    # zero weight rows, padded biases are zero, padded outputs are sliced off).
    # TODO(synk): when MXU-bound with dims that are odd multiples of 128,
    # padding to 256 keeps the v6e/v7x 256x256 array fully utilized.
    pdims = [_round_up(d, _LANE) for d in dims]
    max_pd = max(pdims)

    wb = []  # [w0, b0, w1, b1, ...] padded; weights bf16, biases f32
    for li, (w, b) in enumerate(params):
        fi, fo = w.shape
        wp = jnp.zeros((pdims[li], pdims[li + 1]), jnp.bfloat16)
        wp = wp.at[:fi, :fo].set(w.astype(jnp.bfloat16))
        bp = jnp.zeros((1, pdims[li + 1]), jnp.float32).at[0, :fo].set(
            b.astype(jnp.float32))
        wb += [wp, bp]

    weight_bytes = (sum(pdims[li] * pdims[li + 1] for li in range(n_layers)) * 2
                    + sum(pdims[li + 1] for li in range(n_layers)) * 4)

    phys = _vmem_cap_bytes()
    # Keep the fully-resident fused path only while it comfortably fits
    # (~28 MiB budget on v7x's 64 MiB, ~60 MiB on v5e/v6e's 128 MiB).
    fused_threshold = phys // 2 - (4 << 20)
    limit_cap = max(phys - (8 << 20), 32 << 20)

    def _fused_vmem(bm):
        return (2 * bm * pdims[0] * 2        # bf16 input tile, double-buffered
                + 2 * bm * pdims[-1] * 4     # f32 output tile, double-buffered
                + weight_bytes               # single-buffered resident weights
                + 3 * 4 * bm * max_pd)       # live f32 intermediate activations

    def forward(x):
        assert x.ndim == 2 and x.shape[1] == f_in
        B = x.shape[0]

        # ---- batch tiling --------------------------------------------------
        bm = min(_round_up(B, _SUB), block_m)
        if B > 16:
            # >= 2 batch tiles so the "parallel" axis can use both v7x cores.
            bm = min(bm, _round_up((B + 1) // 2, _SUB))
        while bm > 64 and _fused_vmem(bm) > fused_threshold:
            bm = _round_up(bm // 2, _SUB)    # shrink tile before giving up on fusion
        b_pad = _round_up(B, bm)
        grid_m = b_pad // bm

        # Pad activations to a lane-dense bf16 slab (halves input DMA bytes).
        xp = jnp.zeros((b_pad, pdims[0]), jnp.bfloat16)
        xp = xp.at[:B, :f_in].set(x.astype(jnp.bfloat16))

        use_fused = (not force_tiled) and _fused_vmem(bm) <= fused_threshold

        if use_fused:
            vmem_limit = int(min(max(_fused_vmem(bm) + (16 << 20), 32 << 20),
                                 limit_cap))
            in_specs = [pl.BlockSpec((bm, pdims[0]), lambda i: (i, 0))]
            for li in range(n_layers):
                in_specs.append(
                    _resident_spec((pdims[li], pdims[li + 1]), lambda i: (0, 0)))
                in_specs.append(
                    _resident_spec((1, pdims[li + 1]), lambda i: (0, 0)))
            out_p = pl.pallas_call(
                functools.partial(_fused_mlp_kernel, n_layers=n_layers),
                out_shape=jax.ShapeDtypeStruct((b_pad, pdims[-1]), jnp.float32),
                grid=(grid_m,),
                in_specs=in_specs,
                out_specs=pl.BlockSpec((bm, pdims[-1]), lambda i: (i, 0)),
                compiler_params=pltpu.CompilerParams(
                    dimension_semantics=("parallel",),
                    vmem_limit_bytes=vmem_limit),
            )(xp, *wb)
            return out_p[:B, :f_out]

        # ---- K/N-tiled per-layer fallback (weights stream through VMEM) -----
        h = xp
        for li in range(n_layers):
            last = li == n_layers - 1
            pk, pn = pdims[li], pdims[li + 1]
            tk, tn = _pick_tile(pk), _pick_tile(pn)
            est = (2 * bm * tk * 2 + 2 * tk * tn * 2 + 2 * tn * 4
                   + 2 * bm * tn * 4 + bm * tn * 4)
            vmem_limit = int(min(max(est + (16 << 20), 32 << 20), limit_cap))
            h = pl.pallas_call(
                functools.partial(_linear_act_kernel, apply_act=not last),
                out_shape=jax.ShapeDtypeStruct(
                    (b_pad, pn), jnp.float32 if last else jnp.bfloat16),
                grid=(grid_m, pn // tn, pk // tk),
                in_specs=[pl.BlockSpec((bm, tk), lambda i, j, k: (i, k)),
                          pl.BlockSpec((tk, tn), lambda i, j, k: (k, j)),
                          pl.BlockSpec((1, tn), lambda i, j, k: (0, j))],
                out_specs=pl.BlockSpec((bm, tn), lambda i, j, k: (i, j)),
                scratch_shapes=[pltpu.VMEM((bm, tn), jnp.float32)],
                compiler_params=pltpu.CompilerParams(
                    dimension_semantics=("parallel", "parallel", "arbitrary"),
                    vmem_limit_bytes=vmem_limit),
            )(h, wb[2 * li], wb[2 * li + 1])
        return h[:B, :f_out]

    return jax.jit(forward)


# ---------------------------------------------------------------------------
# Init + reference (mirror of the PyTorch module)
# ---------------------------------------------------------------------------
def init_mlp_params(key, in_features, out_features, n_hidden, hidden_size):
    """nn.Linear-style init (uniform +/- 1/sqrt(fan_in)); weights stored
    [F_in, F_out] (transposed vs. PyTorch)."""
    params = []
    dims = [in_features] + [hidden_size] * n_hidden + [out_features]
    for i in range(len(dims) - 1):
        fi, fo = dims[i], dims[i + 1]
        key, kw, kb = jax.random.split(key, 3)
        bound = 1.0 / math.sqrt(fi)
        w = jax.random.uniform(kw, (fi, fo), jnp.float32, -bound, bound)
        b = jax.random.uniform(kb, (fo,), jnp.float32, -bound, bound)
        params.append((w, b))
    return params


def mlp_reference(x, params):
    n_layers = len(params)
    h = x.astype(jnp.float32)
    for li, (w, b) in enumerate(params):
        h = h @ w + b
        if li != n_layers - 1:
            h = jnp.where(h >= 0.0, h, _NEG_SLOPE * h)
    return h


if __name__ == "__main__":
    # Shapes consistent with the module: MLP(in_features=16, out_features=8,
    # n_hidden=2, hidden_size=32) applied to a batch of 8 vectors.
    in_features, out_features, n_hidden, hidden_size = 16, 8, 2, 32
    batch = 8

    key = jax.random.PRNGKey(0)
    key, kx = jax.random.split(key)
    x = jax.random.normal(kx, (batch, in_features), jnp.float32)
    params = init_mlp_params(key, in_features, out_features, n_hidden, hidden_size)

    fwd = make_mlp_forward(params)
    out = jax.block_until_ready(fwd(x))
    ref = mlp_reference(x, params)
    assert out.shape == (batch, out_features)
    assert jnp.allclose(out, ref, atol=2e-2, rtol=2e-2), float(
        jnp.max(jnp.abs(out - ref)))

    # Also exercise the K/N-tiled fallback (used when the resident weight set
    # would not fit VMEM) on a slightly larger MLP, forced here for coverage.
    key, kx2, kp2 = jax.random.split(key, 3)
    params2 = init_mlp_params(kp2, 48, 24, 2, 192)
    x2 = jax.random.normal(kx2, (40, 48), jnp.float32)
    fwd2 = make_mlp_forward(params2, force_tiled=True)
    out2 = jax.block_until_ready(fwd2(x2))
    ref2 = mlp_reference(x2, params2)
    assert out2.shape == (40, 24)
    assert jnp.allclose(out2, ref2, atol=2e-2, rtol=2e-2), float(
        jnp.max(jnp.abs(out2 - ref2)))

    print("KERNEL_OK")
</pallas_src>

<mosaic_0001>
module attributes {stable_mosaic.version = 11 : i64} {
  func.func @_fused_mlp_kernel(%arg0: i32, %arg1: memref<16x128xbf16, #tpu.memory_space<vmem>>, %arg2: memref<128x128xbf16, #tpu.memory_space<vmem>>, %arg3: memref<1x128xf32, #tpu.memory_space<vmem>>, %arg4: memref<128x128xbf16, #tpu.memory_space<vmem>>, %arg5: memref<1x128xf32, #tpu.memory_space<vmem>>, %arg6: memref<128x128xbf16, #tpu.memory_space<vmem>>, %arg7: memref<1x128xf32, #tpu.memory_space<vmem>>, %arg8: memref<16x128xf32, #tpu.memory_space<vmem>>) attributes {dimension_semantics = [#tpu.dimension_semantics<parallel>], iteration_bounds = array<i64: 1>, scalar_prefetch = 0 : i64, scratch_operands = 0 : i64, tpu.core_type = #tpu.core_type<tc>, window_params = [{transform_indices = @transform_0, window_bounds = array<i64: 16, 128>}, {pipeline_mode = #tpu.pipeline_mode<synchronous>, transform_indices = @transform_1, window_bounds = array<i64: 128, 128>}, {pipeline_mode = #tpu.pipeline_mode<synchronous>, transform_indices = @transform_2, window_bounds = array<i64: 1, 128>}, {pipeline_mode = #tpu.pipeline_mode<synchronous>, transform_indices = @transform_3, window_bounds = array<i64: 128, 128>}, {pipeline_mode = #tpu.pipeline_mode<synchronous>, transform_indices = @transform_4, window_bounds = array<i64: 1, 128>}, {pipeline_mode = #tpu.pipeline_mode<synchronous>, transform_indices = @transform_5, window_bounds = array<i64: 128, 128>}, {pipeline_mode = #tpu.pipeline_mode<synchronous>, transform_indices = @transform_6, window_bounds = array<i64: 1, 128>}, {transform_indices = @transform_7, window_bounds = array<i64: 16, 128>}]} {
    %c0 = arith.constant 0 : index
    %c0_0 = arith.constant 0 : index
    %0 = vector.load %arg1[%c0, %c0_0] : memref<16x128xbf16, #tpu.memory_space<vmem>>, vector<16x128xbf16>
    %c0_1 = arith.constant 0 : index
    %c0_2 = arith.constant 0 : index
    %1 = vector.load %arg2[%c0_1, %c0_2] : memref<128x128xbf16, #tpu.memory_space<vmem>>, vector<128x128xbf16>
    %c0_3 = arith.constant 0 : index
    %c0_4 = arith.constant 0 : index
    %2 = vector.load %arg3[%c0_3, %c0_4] : memref<1x128xf32, #tpu.memory_space<vmem>>, vector<1x128xf32>
    %cst = arith.constant dense<0.000000e+00> : vector<16x128xf32>
    %3 = tpu.matmul %0, %1, %cst {dimension_numbers = #tpu.dot_dimension_numbers<[1], [0], [0], [1], [0, 0, 1, 1], [], []>} : vector<16x128xbf16>, vector<128x128xbf16>, vector<16x128xf32> -> vector<16x128xf32>
    %4 = vector.broadcast %2 : vector<1x128xf32> to vector<16x128xf32>
    %5 = arith.addf %3, %4 : vector<16x128xf32>
    %cst_5 = arith.constant 0.000000e+00 : f32
    %6 = vector.broadcast %cst_5 : f32 to vector<16x128xf32>
    %7 = arith.cmpf oge, %5, %6 : vector<16x128xf32>
    %cst_6 = arith.constant 2.000000e-02 : f32
    %8 = vector.broadcast %cst_6 : f32 to vector<16x128xf32>
    %9 = arith.mulf %8, %5 : vector<16x128xf32>
    %10 = arith.select %7, %5, %9 : vector<16x128xi1>, vector<16x128xf32>
    %11 = arith.truncf %10 : vector<16x128xf32> to vector<16x128xbf16>
    %c0_7 = arith.constant 0 : index
    %c0_8 = arith.constant 0 : index
    %12 = vector.load %arg4[%c0_7, %c0_8] : memref<128x128xbf16, #tpu.memory_space<vmem>>, vector<128x128xbf16>
    %c0_9 = arith.constant 0 : index
    %c0_10 = arith.constant 0 : index
    %13 = vector.load %arg5[%c0_9, %c0_10] : memref<1x128xf32, #tpu.memory_space<vmem>>, vector<1x128xf32>
    %cst_11 = arith.constant dense<0.000000e+00> : vector<16x128xf32>
    %14 = tpu.matmul %11, %12, %cst_11 {dimension_numbers = #tpu.dot_dimension_numbers<[1], [0], [0], [1], [0, 0, 1, 1], [], []>} : vector<16x128xbf16>, vector<128x128xbf16>, vector<16x128xf32> -> vector<16x128xf32>
    %15 = vector.broadcast %13 : vector<1x128xf32> to vector<16x128xf32>
    %16 = arith.addf %14, %15 : vector<16x128xf32>
    %cst_12 = arith.constant 0.000000e+00 : f32
    %17 = vector.broadcast %cst_12 : f32 to vector<16x128xf32>
    %18 = arith.cmpf oge, %16, %17 : vector<16x128xf32>
    %cst_13 = arith.constant 2.000000e-02 : f32
    %19 = vector.broadcast %cst_13 : f32 to vector<16x128xf32>
    %20 = arith.mulf %19, %16 : vector<16x128xf32>
    %21 = arith.select %18, %16, %20 : vector<16x128xi1>, vector<16x128xf32>
    %22 = arith.truncf %21 : vector<16x128xf32> to vector<16x128xbf16>
    %c0_14 = arith.constant 0 : index
    %c0_15 = arith.constant 0 : index
    %23 = vector.load %arg6[%c0_14, %c0_15] : memref<128x128xbf16, #tpu.memory_space<vmem>>, vector<128x128xbf16>
    %c0_16 = arith.constant 0 : index
    %c0_17 = arith.constant 0 : index
    %24 = vector.load %arg7[%c0_16, %c0_17] : memref<1x128xf32, #tpu.memory_space<vmem>>, vector<1x128xf32>
    %cst_18 = arith.constant dense<0.000000e+00> : vector<16x128xf32>
    %25 = tpu.matmul %22, %23, %cst_18 {dimension_numbers = #tpu.dot_dimension_numbers<[1], [0], [0], [1], [0, 0, 1, 1], [], []>} : vector<16x128xbf16>, vector<128x128xbf16>, vector<16x128xf32> -> vector<16x128xf32>
    %26 = vector.broadcast %24 : vector<1x128xf32> to vector<16x128xf32>
    %27 = arith.addf %25, %26 : vector<16x128xf32>
    %c0_19 = arith.constant 0 : index
    %c0_20 = arith.constant 0 : index
    %28 = vector.load %arg8[%c0_19, %c0_20] : memref<16x128xf32, #tpu.memory_space<vmem>>, vector<16x128xf32>
    tpu.vector_store %arg8[%c0_19, %c0_20], %27 {strides = array<i32>} : memref<16x128xf32, #tpu.memory_space<vmem>>, vector<16x128xf32>,
    return
  }
  func.func @transform_0(%arg0: i32) -> (i32, i32) {
    %c0_i32 = arith.constant 0 : i32
    %c0_i32_0 = arith.constant 0 : i32
    return %arg0, %c0_i32 : i32, i32
  }
  func.func @transform_1(%arg0: i32) -> (i32, i32) {
    %c0_i32 = arith.constant 0 : i32
    %c0_i32_0 = arith.constant 0 : i32
    %c0_i32_1 = arith.constant 0 : i32
    return %c0_i32, %c0_i32_0 : i32, i32
  }
  func.func @transform_2(%arg0: i32) -> (i32, i32) {
    %c0_i32 = arith.constant 0 : i32
    %c0_i32_0 = arith.constant 0 : i32
    %c0_i32_1 = arith.constant 0 : i32
    return %c0_i32, %c0_i32_0 : i32, i32
  }
  func.func @transform_3(%arg0: i32) -> (i32, i32) {
    %c0_i32 = arith.constant 0 : i32
    %c0_i32_0 = arith.constant 0 : i32
    %c0_i32_1 = arith.constant 0 : i32
    return %c0_i32, %c0_i32_0 : i32, i32
  }
  func.func @transform_4(%arg0: i32) -> (i32, i32) {
    %c0_i32 = arith.constant 0 : i32
    %c0_i32_0 = arith.constant 0 : i32
    %c0_i32_1 = arith.constant 0 : i32
    return %c0_i32, %c0_i32_0 : i32, i32
  }
  func.func @transform_5(%arg0: i32) -> (i32, i32) {
    %c0_i32 = arith.constant 0 : i32
    %c0_i32_0 = arith.constant 0 : i32
    %c0_i32_1 = arith.constant 0 : i32
    return %c0_i32, %c0_i32_0 : i32, i32
  }
  func.func @transform_6(%arg0: i32) -> (i32, i32) {
    %c0_i32 = arith.constant 0 : i32
    %c0_i32_0 = arith.constant 0 : i32
    %c0_i32_1 = arith.constant 0 : i32
    return %c0_i32, %c0_i32_0 : i32, i32
  }
  func.func @transform_7(%arg0: i32) -> (i32, i32) {
    %c0_i32 = arith.constant 0 : i32
    %c0_i32_0 = arith.constant 0 : i32
    return %arg0, %c0_i32 : i32, i32
  }
}

</mosaic_0001>

<llo_original>
// kernel: forward.1
$region0: #{forward.1}
  #allocation0 [shape = 'u32[]', space=smem, size = 0x4, offset = 0x4, fixed_abs, tag = 'smem constant byte address 0x4 - core index']
  #allocation1 [shape = 'u32[72,128]{1,0:T(1,128)}', space=vmem, size = 0x9000, scoped, tag = 'internal scratch']
  %s0 = inlined_call_operand.vmem [shape: bf16[16,128], index: 0, kind: input, shape index: {}]
  %s1 = inlined_call_operand.hbm [shape: bf16[128,128], index: 1, kind: input, shape index: {}]
  %s2 = inlined_call_operand.vmem [shape: f32[1,128], index: 2, kind: input, shape index: {}]
  %s3 = inlined_call_operand.hbm [shape: bf16[128,128], index: 3, kind: input, shape index: {}]
  %s4 = inlined_call_operand.vmem [shape: f32[1,128], index: 4, kind: input, shape index: {}]
  %s5 = inlined_call_operand.hbm [shape: bf16[128,128], index: 5, kind: input, shape index: {}]
  %s6 = inlined_call_operand.vmem [shape: f32[1,128], index: 6, kind: input, shape index: {}]
  %s7 = inlined_call_operand.vmem [shape: f32[16,128], index: 7, kind: output, shape index: {}]
  %s8 = sld [smem:[#allocation0]]
  $region50: #{forward.1} parent=0
    _
  %s10 = ssub.s32 1, %s8
  %s11 = scalar_select 0, %s10, %s8
  $region1: #{forward.1} parent=0
    #allocation2 [shape = 'u8[32768]{0}', space=vmem, size = 0x8000, scoped, tag = 'input window, operand 1, single buffered']
    #allocation3 [shape = 's32[1]{0}', space=sflag, size = 0x4, scoped, tag = 'scoped memory for forward.1']
    #allocation4 [shape = 'u8[32768]{0}', space=vmem, size = 0x8000, scoped, tag = 'input window, operand 3, single buffered']
    #allocation5 [shape = 's32[1]{0}', space=sflag, size = 0x4, scoped, tag = 'scoped memory for forward.1']
    #allocation6 [shape = 'u8[32768]{0}', space=vmem, size = 0x8000, scoped, tag = 'input window, operand 5, single buffered']
    %12 = vsyncpa [#allocation3], 0
    %13 = vsyncpa [#allocation5], 0
    // Predicated region
    $region2: #{forward.1} parent=1 // pred_check
      _
    $region3: #{forward.1} parent=1 // pred_check_branch
      %15 = sbr.rel (0) target = $region5
    $region4: #{forward.1} parent=1 // pred_region
      _
    $region5: #{forward.1} parent=1 // pred_fallthru
      _
    // Predicated region
    $region6: #{forward.1} parent=1 // pred_check
      _
    $region7: #{forward.1} parent=1 // pred_check_branch
      %17 = sbr.rel (0) target = $region9
    $region8: #{forward.1} parent=1 // pred_region
      %19 = vsyncadd [#allocation3], 0
      %s20 = sshll.u32 %s1, 4
      %s21 = int_to_ptr.hbm [resolvable:$true] %s20
      %s22 = sshll.u32 [#allocation2], 4
      %s23 = int_to_ptr.vmem [resolvable:$true] %s22
      %28 = dma.hbm_to_vmem [thread:$0]  %s21, 1024, %s23, [#allocation3], 64, 64, 4
    $region9: #{forward.1} parent=1 // pred_fallthru
      _
    // Predicated region
    $region10: #{forward.1} parent=1 // pred_check
      _
    $region11: #{forward.1} parent=1 // pred_check_branch
      %30 = sbr.rel (0) target = $region13
    $region12: #{forward.1} parent=1 // pred_region
      _
    $region13: #{forward.1} parent=1 // pred_fallthru
      _
    // Predicated region
    $region14: #{forward.1} parent=1 // pred_check
      _
    $region15: #{forward.1} parent=1 // pred_check_branch
      %32 = sbr.rel (0) target = $region17
    $region16: #{forward.1} parent=1 // pred_region
      %34 = vsyncadd [#allocation5], 0
      %s35 = sshll.u32 %s3, 4
      %s36 = int_to_ptr.hbm [resolvable:$true] %s35
      %s37 = sshll.u32 [#allocation4], 4
      %s38 = int_to_ptr.vmem [resolvable:$true] %s37
      %43 = dma.hbm_to_vmem [thread:$0]  %s36, 1024, %s38, [#allocation5], 64, 64, 4
    $region17: #{forward.1} parent=1 // pred_fallthru
      _
    // Predicated region
    $region18: #{forward.1} parent=1 // pred_check
      _
    $region19: #{forward.1} parent=1 // pred_check_branch
      %45 = sbr.rel (0) target = $region21
    $region20: #{forward.1} parent=1 // pred_region
      _
    $region21: #{forward.1} parent=1 // pred_fallthru
      _
    // Predicated region
    $region22: #{forward.1} parent=1 // pred_check
      _
    $region23: #{forward.1} parent=1 // pred_check_branch
      %47 = sbr.rel (0) target = $region25
    $region24: #{forward.1} parent=1 // pred_region
      %49 = vsyncadd [#allocation5], 0
      %s50 = sshll.u32 %s5, 4
      %s51 = int_to_ptr.hbm [resolvable:$true] %s50
      %s52 = sshll.u32 [#allocation6], 4
      %s53 = int_to_ptr.vmem [resolvable:$true] %s52
      %58 = dma.hbm_to_vmem [thread:$0]  %s51, 1024, %s53, [#allocation5], 64, 64, 4
    $region25: #{forward.1} parent=1 // pred_fallthru
      _
    // Predicated region
    $region26: #{forward.1} parent=1 // pred_check
      _
    $region27: #{forward.1} parent=1 // pred_check_branch
      %60 = sbr.rel (0) target = $region29
    $region28: #{forward.1} parent=1 // pred_region
      _
    $region29: #{forward.1} parent=1 // pred_fallthru
      _
    // Predicated region
    $region30: #{forward.1} parent=1 // pred_check
      _
    $region31: #{forward.1} parent=1 // pred_check_branch
      %62 = sbr.rel (0) target = $region33
    $region32: #{forward.1} parent=1 // pred_region
      %64 = dma.done [#allocation3], 1024
    $region33: #{forward.1} parent=1 // pred_fallthru
      _
    // Predicated region
    $region34: #{forward.1} parent=1 // pred_check
      _
    $region35: #{forward.1} parent=1 // pred_check_branch
      %66 = sbr.rel (0) target = $region37
    $region36: #{forward.1} parent=1 // pred_region
      %68 = dma.done [#allocation5], 1024
    $region37: #{forward.1} parent=1 // pred_fallthru
      _
    // Predicated region
    $region38: #{forward.1} parent=1 // pred_check
      _
    $region39: #{forward.1} parent=1 // pred_check_branch
      %70 = sbr.rel (0) target = $region41
    $region40: #{forward.1} parent=1 // pred_region
      %72 = dma.done [#allocation5], 1024
    $region41: #{forward.1} parent=1 // pred_fallthru
      _
    %v73 = vld [vmem:[%s0] sm:$0xf]
    %v74 = vld [vmem:[%s0 + $0x4] sm:$0xf]
    %v75 = vld [vmem:[#allocation2] sm:$0xf]
    %v76 = vld [vmem:[#allocation2 + $0x4] sm:$0xf]
    %v77 = vld [vmem:[#allocation2 + $0x8] sm:$0xf]
    %v78 = vld [vmem:[#allocation2 + $0xc] sm:$0xf]
    %v79 = vld [vmem:[#allocation2 + $0x10] sm:$0xf]
    %v80 = vld [vmem:[#allocation2 + $0x14] sm:$0xf]
    %v81 = vld [vmem:[#allocation2 + $0x18] sm:$0xf]
    %v82 = vld [vmem:[#allocation2 + $0x1c] sm:$0xf]
    %v83 = vld [vmem:[#allocation2 + $0x20] sm:$0xf]
    %v84 = vld [vmem:[#allocation2 + $0x24] sm:$0xf]
    %v85 = vld [vmem:[#allocation2 + $0x28] sm:$0xf]
    %v86 = vld [vmem:[#allocation2 + $0x2c] sm:$0xf]
    %v87 = vld [vmem:[#allocation2 + $0x30] sm:$0xf]
    %v88 = vld [vmem:[#allocation2 + $0x34] sm:$0xf]
    %v89 = vld [vmem:[#allocation2 + $0x38] sm:$0xf]
    %v90 = vld [vmem:[#allocation2 + $0x3c] sm:$0xf]
    %v91 = vld [vmem:[%s2] sm:$0x1]
    %v93 = vperm.slane %v91, 0
    %v97 = vunpack.c.l.b16 %v73
    %v98 = vunpack.c.l.b16 %v74
    %v99 = vpack.c.b16 %v98, %v97
    %v117 = vunpack.c.l.b16 %v75
    %v118 = vunpack.c.l.b16 %v76
    %v119 = vunpack.c.l.b16 %v77
    %v120 = vunpack.c.l.b16 %v78
    %v121 = vunpack.c.l.b16 %v79
    %v122 = vunpack.c.l.b16 %v80
    %v123 = vunpack.c.l.b16 %v81
    %v124 = vunpack.c.l.b16 %v82
    %v125 = vunpack.c.l.b16 %v83
    %v126 = vunpack.c.l.b16 %v84
    %v127 = vunpack.c.l.b16 %v85
    %v128 = vunpack.c.l.b16 %v86
    %v129 = vunpack.c.l.b16 %v87
    %v130 = vunpack.c.l.b16 %v88
    %v131 = vunpack.c.l.b16 %v89
    %v132 = vunpack.c.l.b16 %v90
    %v133 = vpack.c.b16 %v118, %v117
    %v134 = vpack.c.b16 %v120, %v119
    %v135 = vpack.c.b16 %v122, %v121
    %v136 = vpack.c.b16 %v124, %v123
    %v137 = vpack.c.b16 %v126, %v125
    %v138 = vpack.c.b16 %v128, %v127
    %v139 = vpack.c.b16 %v130, %v129
    %v140 = vpack.c.b16 %v132, %v131
    %149 = vmatpush.bf16.msra.mxu0 %v140
    %150 = vmatpush.bf16.msra.mxu0 %v139
    %151 = vmatpush.bf16.msra.mxu0 %v138
    %152 = vmatpush.bf16.msra.mxu0 %v137
    %153 = vmatpush.bf16.msra.mxu0 %v136
    %154 = vmatpush.bf16.msra.mxu0 %v135
    %155 = vmatpush.bf16.msra.mxu0 %v134
    %156 = vmatpush.bf16.msra.mxu0 %v133
    %157 = vmatmul.bf16.gmra.mxu0 %v99
    %v158 = vpop.f32.mrf.mxu0
    %v159 = vadd.f32 %v93, %v158
    %v160 = vpop.f32.mrf.mxu0
    %v161 = vadd.f32 %v93, %v160
    %162 = vdwg.mxu0
    %vm163 = vcmp.ge.f32.partialorder %v159, 0.0
    %vm164 = vcmp.ge.f32.partialorder %v161, 0.0
    %v165 = vmul.f32 %v159, 0.02
    %v166 = vmul.f32 %v161, 0.02
    %v167 = vsel %vm163, %v159, %v165
    %v168 = vsel %vm164, %v161, %v166
    %v169 = vpack.c.bf16 %v168, %v167
    %v170 = vld [vmem:[#allocation4] sm:$0xf]
    %v171 = vld [vmem:[#allocation4 + $0x4] sm:$0xf]
    %v172 = vld [vmem:[#allocation4 + $0x8] sm:$0xf]
    %v173 = vld [vmem:[#allocation4 + $0xc] sm:$0xf]
    %v174 = vld [vmem:[#allocation4 + $0x10] sm:$0xf]
    %v175 = vld [vmem:[#allocation4 + $0x14] sm:$0xf]
    %v176 = vld [vmem:[#allocation4 + $0x18] sm:$0xf]
    %v177 = vld [vmem:[#allocation4 + $0x1c] sm:$0xf]
    %v178 = vld [vmem:[#allocation4 + $0x20] sm:$0xf]
    %v179 = vld [vmem:[#allocation4 + $0x24] sm:$0xf]
    %v180 = vld [vmem:[#allocation4 + $0x28] sm:$0xf]
    %v181 = vld [vmem:[#allocation4 + $0x2c] sm:$0xf]
    %v182 = vld [vmem:[#allocation4 + $0x30] sm:$0xf]
    %v183 = vld [vmem:[#allocation4 + $0x34] sm:$0xf]
    %v184 = vld [vmem:[#allocation4 + $0x38] sm:$0xf]
    %v185 = vld [vmem:[#allocation4 + $0x3c] sm:$0xf]
    %v186 = vld [vmem:[%s4] sm:$0x1]
    %v188 = vperm.slane %v186, 0
    %v206 = vunpack.c.l.b16 %v170
    %v207 = vunpack.c.l.b16 %v171
    %v208 = vunpack.c.l.b16 %v172
    %v209 = vunpack.c.l.b16 %v173
    %v210 = vunpack.c.l.b16 %v174
    %v211 = vunpack.c.l.b16 %v175
    %v212 = vunpack.c.l.b16 %v176
    %v213 = vunpack.c.l.b16 %v177
    %v214 = vunpack.c.l.b16 %v178
    %v215 = vunpack.c.l.b16 %v179
    %v216 = vunpack.c.l.b16 %v180
    %v217 = vunpack.c.l.b16 %v181
    %v218 = vunpack.c.l.b16 %v182
    %v219 = vunpack.c.l.b16 %v183
    %v220 = vunpack.c.l.b16 %v184
    %v221 = vunpack.c.l.b16 %v185
    %v222 = vpack.c.b16 %v207, %v206
    %v223 = vpack.c.b16 %v209, %v208
    %v224 = vpack.c.b16 %v211, %v210
    %v225 = vpack.c.b16 %v213, %v212
    %v226 = vpack.c.b16 %v215, %v214
    %v227 = vpack.c.b16 %v217, %v216
    %v228 = vpack.c.b16 %v219, %v218
    %v229 = vpack.c.b16 %v221, %v220
    %238 = vmatpush.bf16.msra.mxu0 %v229
    %239 = vmatpush.bf16.msra.mxu0 %v228
    %240 = vmatpush.bf16.msra.mxu0 %v227
    %241 = vmatpush.bf16.msra.mxu0 %v226
    %242 = vmatpush.bf16.msra.mxu0 %v225
    %243 = vmatpush.bf16.msra.mxu0 %v224
    %244 = vmatpush.bf16.msra.mxu0 %v223
    %245 = vmatpush.bf16.msra.mxu0 %v222
    %246 = vmatmul.bf16.gmra.mxu0 %v169
    %v247 = vpop.f32.mrf.mxu0
    %v248 = vadd.f32 %v188, %v247
    %v249 = vpop.f32.mrf.mxu0
    %v250 = vadd.f32 %v188, %v249
    %251 = vdwg.mxu0
    %vm252 = vcmp.ge.f32.partialorder %v248, 0.0
    %vm253 = vcmp.ge.f32.partialorder %v250, 0.0
    %v254 = vmul.f32 %v248, 0.02
    %v255 = vmul.f32 %v250, 0.02
    %v256 = vsel %vm252, %v248, %v254
    %v257 = vsel %vm253, %v250, %v255
    %v258 = vpack.c.bf16 %v257, %v256
    %v259 = vld [vmem:[#allocation6] sm:$0xf]
    %v260 = vld [vmem:[#allocation6 + $0x4] sm:$0xf]
    %v261 = vld [vmem:[#allocation6 + $0x8] sm:$0xf]
    %v262 = vld [vmem:[#allocation6 + $0xc] sm:$0xf]
    %v263 = vld [vmem:[#allocation6 + $0x10] sm:$0xf]
    %v264 = vld [vmem:[#allocation6 + $0x14] sm:$0xf]
    %v265 = vld [vmem:[#allocation6 + $0x18] sm:$0xf]
    %v266 = vld [vmem:[#allocation6 + $0x1c] sm:$0xf]
    %v267 = vld [vmem:[#allocation6 + $0x20] sm:$0xf]
    %v268 = vld [vmem:[#allocation6 + $0x24] sm:$0xf]
    %v269 = vld [vmem:[#allocation6 + $0x28] sm:$0xf]
    %v270 = vld [vmem:[#allocation6 + $0x2c] sm:$0xf]
    %v271 = vld [vmem:[#allocation6 + $0x30] sm:$0xf]
    %v272 = vld [vmem:[#allocation6 + $0x34] sm:$0xf]
    %v273 = vld [vmem:[#allocation6 + $0x38] sm:$0xf]
    %v274 = vld [vmem:[#allocation6 + $0x3c] sm:$0xf]
    %v275 = vld [vmem:[%s6] sm:$0x1]
    %v277 = vperm.slane %v275, 0
    %v295 = vunpack.c.l.b16 %v259
    %v296 = vunpack.c.l.b16 %v260
    %v297 = vunpack.c.l.b16 %v261
    %v298 = vunpack.c.l.b16 %v262
    %v299 = vunpack.c.l.b16 %v263
    %v300 = vunpack.c.l.b16 %v264
    %v301 = vunpack.c.l.b16 %v265
    %v302 = vunpack.c.l.b16 %v266
    %v303 = vunpack.c.l.b16 %v267
    %v304 = vunpack.c.l.b16 %v268
    %v305 = vunpack.c.l.b16 %v269
    %v306 = vunpack.c.l.b16 %v270
    %v307 = vunpack.c.l.b16 %v271
    %v308 = vunpack.c.l.b16 %v272
    %v309 = vunpack.c.l.b16 %v273
    %v310 = vunpack.c.l.b16 %v274
    %v311 = vpack.c.b16 %v296, %v295
    %v312 = vpack.c.b16 %v298, %v297
    %v313 = vpack.c.b16 %v300, %v299
    %v314 = vpack.c.b16 %v302, %v301
    %v315 = vpack.c.b16 %v304, %v303
    %v316 = vpack.c.b16 %v306, %v305
    %v317 = vpack.c.b16 %v308, %v307
    %v318 = vpack.c.b16 %v310, %v309
    %327 = vmatpush.bf16.msra.mxu0 %v318
    %328 = vmatpush.bf16.msra.mxu0 %v317
    %329 = vmatpush.bf16.msra.mxu0 %v316
    %330 = vmatpush.bf16.msra.mxu0 %v315
    %331 = vmatpush.bf16.msra.mxu0 %v314
    %332 = vmatpush.bf16.msra.mxu0 %v313
    %333 = vmatpush.bf16.msra.mxu0 %v312
    %334 = vmatpush.bf16.msra.mxu0 %v311
    %335 = vmatmul.bf16.gmra.mxu0 %v258
    %v336 = vpop.f32.mrf.mxu0
    %v337 = vadd.f32 %v277, %v336
    %v338 = vpop.f32.mrf.mxu0
    %v339 = vadd.f32 %v277, %v338
    %340 = vdwg.mxu0
    %341 = vst [vmem:[%s7] sm:$0xff] %v337
    %342 = vst [vmem:[%s7 + $0x8] sm:$0xff] %v339
    // Predicated region
    $region42: #{forward.1} parent=1 // pred_check
      _
    $region43: #{forward.1} parent=1 // pred_check_branch
      %344 = sbr.rel (0) target = $region45
    $region44: #{forward.1} parent=1 // pred_region
      _
    $region45: #{forward.1} parent=1 // pred_fallthru
      _
    // Predicated region
    $region46: #{forward.1} parent=1 // pred_check
      _
    $region47: #{forward.1} parent=1 // pred_check_branch
      %346 = sbr.rel (0) target = $region49
    $region48: #{forward.1} parent=1 // pred_region
      _
    $region49: #{forward.1} parent=1 // pred_fallthru
      _
    %347 = vsyncpa [#allocation3], 1
    %348 = vsyncpa [#allocation5], 1

</llo_original>
